<compile_context>
chip_gen: v7x
topology: tpu7x:2x2x1
jax: 0.10.0
libtpu: 0.0.40
codegen_flags: <defaults>
</compile_context>

<pallas_src>
import functools

import numpy as np
import jax
import jax.numpy as jnp
from jax import lax
from jax.experimental import pallas as pl
from jax.experimental.pallas import tpu as pltpu

FG_IOU_THRESH = 0.5
BG_IOU_THRESH = 0.4   # only used by the numpy reference (-1 vs -2 never reach the loss)
WEIGHTS = (1.0, 1.0, 1.0, 1.0)

_NEG = -1e30


def _round_up(x, m):
    return ((x + m - 1) // m) * m


def _set_criterion_kernel(gt_ref, gt_t_ref, gt_valid_ref, breg_ref, aux_ref,
                          out_ref, *, iou_approx):
    """One grid step: a block of BB images vs all (padded) anchors."""
    gt = gt_ref[...]            # [BB, G, 4]  xyxy
    gt_t = gt_t_ref[...]        # [BB, 4, G]  xyxy transposed (MXU gather operand)
    gvalid = gt_valid_ref[...]  # [BB, G, 1]  1.0 = real gt box
    breg = breg_ref[...]        # [BB, 4, A]  bbox_regression, coord-major
    aux = aux_ref[...]          # [16, A]     precomputed anchor quantities

    BB, G, _ = gt.shape
    A = aux.shape[1]

    # ---- batch-invariant anchor rows (precomputed once in the wrapper) ----
    ax1 = aux[0:1, :][None]     # [1, 1, A]
    ay1 = aux[1:2, :][None]
    ax2 = aux[2:3, :][None]
    ay2 = aux[3:4, :][None]
    area_a = aux[4:5, :][None]
    ex_cx = aux[5:6, :][None]
    ex_cy = aux[6:7, :][None]
    inv_ex_w = aux[7:8, :][None]
    inv_ex_h = aux[8:9, :][None]
    avalid = aux[9:10, :][None]  # 1.0 = real anchor column

    # ---- gt column views ----
    gx1 = gt[:, :, 0:1]; gy1 = gt[:, :, 1:2]       # [BB, G, 1]
    gx2 = gt[:, :, 2:3]; gy2 = gt[:, :, 3:4]

    # ---- box_iou(gt, anchors): intersection / union ----
    inter_w = jnp.maximum(jnp.minimum(gx2, ax2) - jnp.maximum(gx1, ax1), 0.0)
    inter_h = jnp.maximum(jnp.minimum(gy2, ay2) - jnp.maximum(gy1, ay1), 0.0)
    inter = inter_w * inter_h                       # [BB, G, A]
    area_g = (gx2 - gx1) * (gy2 - gy1)              # [BB, G, 1]
    union = jnp.maximum(area_g + area_a - inter, 1e-12)   # guard 0/0 for degenerate boxes

    valid = jnp.logical_and(gvalid > 0.5, avalid > 0.5)   # [BB, G, A]

    # ---- Matcher ----
    if iou_approx:
        # EUP reciprocal (approx); keep the foreground test exact & division-free:
        # max_g iou >= 0.5  <=>  max_g(inter - 0.5*union) >= 0
        iou = inter * pl.reciprocal(union, approx=True)
        ge_fg = jnp.max(jnp.where(valid, inter - FG_IOU_THRESH * union, _NEG),
                        axis=1, keepdims=True) >= 0.0     # [BB, 1, A]
        iou_m = jnp.where(valid, iou, -1.0)
        matched_vals = jnp.max(iou_m, axis=1, keepdims=True)
    else:
        iou = inter / union                                # exact parity with reference
        iou_m = jnp.where(valid, iou, -1.0)
        matched_vals = jnp.max(iou_m, axis=1, keepdims=True)
        ge_fg = matched_vals >= FG_IOU_THRESH              # reuse the max: 1 fewer G x A op

    g_iota = lax.broadcasted_iota(jnp.int32, (BB, G, A), 1)

    cand = jnp.where(iou_m == matched_vals, g_iota, G)
    all_matches = jnp.min(cand, axis=1, keepdims=True)     # first argmax over gt

    # allow_low_quality_matches: anchors achieving a gt's best IoU become foreground.
    highest_q = jnp.max(iou_m, axis=2, keepdims=True)      # [BB, G, 1]
    is_best = jnp.logical_and(iou_m == highest_q, valid)
    update = jnp.max(is_best.astype(jnp.float32), axis=1, keepdims=True) > 0.0

    fg = jnp.logical_or(update, ge_fg)                     # [BB, 1, A]

    # ---- gather matched gt boxes with a one-hot MXU contraction ----
    idx = jnp.where(fg, all_matches, 0)
    sel = (g_iota == idx).astype(jnp.float32)              # [BB, G, A]
    mgt = jnp.einsum('bcg,bga->bca', gt_t, sel,
                     preferred_element_type=jnp.float32)   # [BB, 4, A]
    mgx1 = mgt[:, 0:1, :]; mgy1 = mgt[:, 1:2, :]
    mgx2 = mgt[:, 2:3, :]; mgy2 = mgt[:, 3:4, :]

    # ---- BoxCoder.encode_single (anchor terms hoisted; weights = 1,1,1,1) ----
    wx, wy, ww, wh = WEIGHTS
    gt_w = mgx2 - mgx1
    gt_h = mgy2 - mgy1
    gt_cx = mgx1 + 0.5 * gt_w
    gt_cy = mgy1 + 0.5 * gt_h

    tdx = wx * (gt_cx - ex_cx) * inv_ex_w
    tdy = wy * (gt_cy - ex_cy) * inv_ex_h
    tdw = ww * jnp.log(gt_w * inv_ex_w)
    tdh = wh * jnp.log(gt_h * inv_ex_h)

    # ---- per-image L1 numerator and foreground count ----
    l1 = (jnp.abs(breg[:, 0:1, :] - tdx) + jnp.abs(breg[:, 1:2, :] - tdy)
          + jnp.abs(breg[:, 2:3, :] - tdw) + jnp.abs(breg[:, 3:4, :] - tdh))
    l1 = jnp.where(fg, l1, 0.0)

    num_img = jnp.sum(l1, axis=2, keepdims=True)                         # [BB, 1, 1]
    cnt_img = jnp.sum(fg.astype(jnp.float32), axis=2, keepdims=True)     # [BB, 1, 1]

    # Single lane-dense (128-wide) unmasked store: row 0 = L1 sum, row 1 = num_fg.
    out_ref[...] = jnp.broadcast_to(jnp.concatenate([num_img, cnt_img], axis=1),
                                    out_ref.shape)


@functools.partial(jax.jit, static_argnames=("batch_block", "iou_approx"))
def set_criterion_loss(gt_boxes, num_gt, bbox_regression, anchors, *,
                       batch_block=None, iou_approx=False):
    """gt_boxes [B,G,4], num_gt [B] int, bbox_regression [B,A,4], anchors [A,4] -> scalar loss."""
    B, G, _ = gt_boxes.shape
    A = anchors.shape[0]

    # ---- TPU-friendly padding: G -> x8 sublanes, A -> x128 lanes ----
    G_pad = max(8, _round_up(G, 8))
    A_pad = max(128, _round_up(A, 128))

    if batch_block is None or batch_block >= B:
        BB, B_pad = B, B
    else:
        BB = int(batch_block)
        B_pad = _round_up(B, BB)
    nb = B_pad // BB

    gt = jnp.pad(gt_boxes.astype(jnp.float32),
                 ((0, B_pad - B), (0, G_pad - G), (0, 0)))                # [B_pad, G_pad, 4]
    gt_t = jnp.transpose(gt, (0, 2, 1))                                   # [B_pad, 4, G_pad]

    ng = jnp.pad(num_gt.astype(jnp.int32), (0, B_pad - B))
    gt_valid = (jnp.arange(G_pad, dtype=jnp.int32)[None, :]
                < ng[:, None]).astype(jnp.float32)[..., None]             # [B_pad, G_pad, 1]

    breg = jnp.transpose(bbox_regression.astype(jnp.float32), (0, 2, 1))  # [B, 4, A]
    breg = jnp.pad(breg, ((0, B_pad - B), (0, 0), (0, A_pad - A)))        # [B_pad, 4, A_pad]

    # ---- batch-invariant anchor quantities, computed once (hoisted from kernel) ----
    anc = anchors.astype(jnp.float32)
    if A_pad > A:
        # far-away unit boxes: zero IoU with real gt, finite widths/heights.
        dummy = jnp.tile(jnp.array([[-1e4, -1e4, -1e4 + 1.0, -1e4 + 1.0]], jnp.float32),
                         (A_pad - A, 1))
        anc = jnp.concatenate([anc, dummy], axis=0)
    ax1, ay1, ax2, ay2 = anc[:, 0], anc[:, 1], anc[:, 2], anc[:, 3]
    ex_w = ax2 - ax1
    ex_h = ay2 - ay1
    aux = jnp.stack([ax1, ay1, ax2, ay2,
                     ex_w * ex_h,                                  # area_a
                     ax1 + 0.5 * ex_w,                             # ex_cx
                     ay1 + 0.5 * ex_h,                             # ex_cy
                     1.0 / ex_w,                                   # inv_ex_w
                     1.0 / ex_h,                                   # inv_ex_h
                     (jnp.arange(A_pad) < A).astype(jnp.float32)], # valid-anchor mask
                    axis=0)
    aux = jnp.pad(aux, ((0, 16 - aux.shape[0]), (0, 0)))                  # [16, A_pad]

    kernel = functools.partial(_set_criterion_kernel, iou_approx=iou_approx)

    out = pl.pallas_call(
        kernel,
        out_shape=jax.ShapeDtypeStruct((B_pad, 2, 128), jnp.float32),
        grid=(nb,),
        in_specs=[
            pl.BlockSpec((BB, G_pad, 4), lambda b: (b, 0, 0)),
            pl.BlockSpec((BB, 4, G_pad), lambda b: (b, 0, 0)),
            pl.BlockSpec((BB, G_pad, 1), lambda b: (b, 0, 0)),
            pl.BlockSpec((BB, 4, A_pad), lambda b: (b, 0, 0)),
            pl.BlockSpec((16, A_pad), lambda b: (0, 0)),
        ],
        out_specs=pl.BlockSpec((BB, 2, 128), lambda b: (b, 0, 0)),
        compiler_params=pltpu.CompilerParams(
            dimension_semantics=("parallel",)),   # no cross-step accumulator
    )(gt, gt_t, gt_valid, breg, aux)

    num = out[:B, 0, 0]                                   # per-image L1 sums
    cnt = out[:B, 1, 0]                                   # per-image num_fg
    return jnp.sum(num / jnp.maximum(1.0, cnt)) / float(max(1, B))


# ----------------- pure numpy reference (mirrors the torch module) -----------------
def _box_iou_np(b1, b2):
    area1 = (b1[:, 2] - b1[:, 0]) * (b1[:, 3] - b1[:, 1])
    area2 = (b2[:, 2] - b2[:, 0]) * (b2[:, 3] - b2[:, 1])
    lt = np.maximum(b1[:, None, :2], b2[None, :, :2])
    rb = np.minimum(b1[:, None, 2:], b2[None, :, 2:])
    wh = np.clip(rb - lt, 0.0, None)
    inter = wh[..., 0] * wh[..., 1]
    return inter / (area1[:, None] + area2[None, :] - inter)


def _matcher_np(q):
    matched_vals = q.max(axis=0)
    matches = q.argmax(axis=0).astype(np.int64)
    all_matches = matches.copy()
    matches[matched_vals < BG_IOU_THRESH] = -1
    matches[(matched_vals >= BG_IOU_THRESH) & (matched_vals < FG_IOU_THRESH)] = -2
    highest = q.max(axis=1)
    _, pred_idx = np.where(q == highest[:, None])
    matches[pred_idx] = all_matches[pred_idx]
    return matches


def _encode_np(gt, proposals):
    wx, wy, ww, wh = WEIGHTS
    ex_w = proposals[:, 2] - proposals[:, 0]
    ex_h = proposals[:, 3] - proposals[:, 1]
    ex_cx = proposals[:, 0] + 0.5 * ex_w
    ex_cy = proposals[:, 1] + 0.5 * ex_h
    gt_w = gt[:, 2] - gt[:, 0]
    gt_h = gt[:, 3] - gt[:, 1]
    gt_cx = gt[:, 0] + 0.5 * gt_w
    gt_cy = gt[:, 1] + 0.5 * gt_h
    return np.stack([wx * (gt_cx - ex_cx) / ex_w,
                     wy * (gt_cy - ex_cy) / ex_h,
                     ww * np.log(gt_w / ex_w),
                     wh * np.log(gt_h / ex_h)], axis=1)


def _ref_loss(gt_boxes, num_gt, bbox_regression, anchors):
    B = gt_boxes.shape[0]
    losses = []
    for i in range(B):
        boxes = gt_boxes[i, : int(num_gt[i])]
        if boxes.size == 0:
            matched = np.full((anchors.shape[0],), -1, dtype=np.int64)
        else:
            matched = _matcher_np(_box_iou_np(boxes, anchors))
        fg = np.where(matched >= 0)[0]
        n_fg = fg.size
        mgt = boxes[matched[fg]] if n_fg > 0 else np.zeros((0, 4), np.float32)
        targ = _encode_np(mgt, anchors[fg])
        losses.append(np.abs(bbox_regression[i][fg] - targ).sum() / max(1, n_fg))
    return sum(losses) / max(1, B)


if __name__ == "__main__":
    B, G, A = 2, 8, 200   # A deliberately not a multiple of 128 to exercise lane padding
    key = jax.random.PRNGKey(0)
    k_anc, k_gt, k_reg = jax.random.split(key, 3)

    def rand_boxes(k, n):
        k1, k2 = jax.random.split(k)
        ctr = jax.random.uniform(k1, (n, 2), minval=10.0, maxval=90.0)
        wh = jax.random.uniform(k2, (n, 2), minval=10.0, maxval=40.0)
        return jnp.concatenate([ctr - 0.5 * wh, ctr + 0.5 * wh], axis=-1).astype(jnp.float32)

    anchors = rand_boxes(k_anc, A)                                               # [A, 4]
    gt_boxes = jnp.stack([rand_boxes(k, G) for k in jax.random.split(k_gt, B)])  # [B, G, 4]
    num_gt = jnp.array([G, 5], dtype=jnp.int32)   # second image uses only 5 gt boxes
    pad_mask = (jnp.arange(G)[None, :, None] < num_gt[:, None, None]).astype(jnp.float32)
    gt_boxes = gt_boxes * pad_mask
    bbox_regression = jax.random.normal(k_reg, (B, A, 4), dtype=jnp.float32)

    loss = set_criterion_loss(gt_boxes, num_gt, bbox_regression, anchors)
    loss = jax.block_until_ready(loss)

    ref = _ref_loss(np.asarray(gt_boxes), np.asarray(num_gt),
                    np.asarray(bbox_regression), np.asarray(anchors))

    np.testing.assert_allclose(float(loss), float(ref), rtol=2e-3, atol=1e-4)
    print("KERNEL_OK")
</pallas_src>

<mosaic_0001>
module attributes {stable_mosaic.version = 11 : i64} {
  func.func @_set_criterion_kernel(%arg0: i32, %arg1: memref<2x8x4xf32, #tpu.memory_space<vmem>>, %arg2: memref<2x4x8xf32, #tpu.memory_space<vmem>>, %arg3: memref<2x8x1xf32, #tpu.memory_space<vmem>>, %arg4: memref<2x4x256xf32, #tpu.memory_space<vmem>>, %arg5: memref<16x256xf32, #tpu.memory_space<vmem>>, %arg6: memref<2x2x128xf32, #tpu.memory_space<vmem>>) attributes {dimension_semantics = [#tpu.dimension_semantics<parallel>], iteration_bounds = array<i64: 1>, scalar_prefetch = 0 : i64, scratch_operands = 0 : i64, tpu.core_type = #tpu.core_type<tc>, window_params = [{transform_indices = @transform_0, window_bounds = array<i64: 2, 8, 4>}, {transform_indices = @transform_1, window_bounds = array<i64: 2, 4, 8>}, {transform_indices = @transform_2, window_bounds = array<i64: 2, 8, 1>}, {transform_indices = @transform_3, window_bounds = array<i64: 2, 4, 256>}, {pipeline_mode = #tpu.pipeline_mode<synchronous>, transform_indices = @transform_4, window_bounds = array<i64: 16, 256>}, {transform_indices = @transform_5, window_bounds = array<i64: 2, 2, 128>}]} {
    %c0 = arith.constant 0 : index
    %c0_0 = arith.constant 0 : index
    %c0_1 = arith.constant 0 : index
    %0 = vector.load %arg1[%c0, %c0_0, %c0_1] : memref<2x8x4xf32, #tpu.memory_space<vmem>>, vector<2x8x4xf32>
    %c0_2 = arith.constant 0 : index
    %c0_3 = arith.constant 0 : index
    %c0_4 = arith.constant 0 : index
    %1 = vector.load %arg2[%c0_2, %c0_3, %c0_4] : memref<2x4x8xf32, #tpu.memory_space<vmem>>, vector<2x4x8xf32>
    %c0_5 = arith.constant 0 : index
    %c0_6 = arith.constant 0 : index
    %c0_7 = arith.constant 0 : index
    %2 = vector.load %arg3[%c0_5, %c0_6, %c0_7] : memref<2x8x1xf32, #tpu.memory_space<vmem>>, vector<2x8x1xf32>
    %c0_8 = arith.constant 0 : index
    %c0_9 = arith.constant 0 : index
    %c0_10 = arith.constant 0 : index
    %3 = vector.load %arg4[%c0_8, %c0_9, %c0_10] : memref<2x4x256xf32, #tpu.memory_space<vmem>>, vector<2x4x256xf32>
    %c0_11 = arith.constant 0 : index
    %c0_12 = arith.constant 0 : index
    %4 = vector.load %arg5[%c0_11, %c0_12] : memref<16x256xf32, #tpu.memory_space<vmem>>, vector<16x256xf32>
    %5 = vector.extract_strided_slice %4 {offsets = [0, 0], sizes = [1, 256], strides = [1, 1]} : vector<16x256xf32> to vector<1x256xf32>
    %6 = vector.shape_cast %5 : vector<1x256xf32> to vector<1x1x256xf32>
    %7 = vector.extract_strided_slice %4 {offsets = [1, 0], sizes = [1, 256], strides = [1, 1]} : vector<16x256xf32> to vector<1x256xf32>
    %8 = vector.shape_cast %7 : vector<1x256xf32> to vector<1x1x256xf32>
    %9 = vector.extract_strided_slice %4 {offsets = [2, 0], sizes = [1, 256], strides = [1, 1]} : vector<16x256xf32> to vector<1x256xf32>
    %10 = vector.shape_cast %9 : vector<1x256xf32> to vector<1x1x256xf32>
    %11 = vector.extract_strided_slice %4 {offsets = [3, 0], sizes = [1, 256], strides = [1, 1]} : vector<16x256xf32> to vector<1x256xf32>
    %12 = vector.shape_cast %11 : vector<1x256xf32> to vector<1x1x256xf32>
    %13 = vector.extract_strided_slice %4 {offsets = [4, 0], sizes = [1, 256], strides = [1, 1]} : vector<16x256xf32> to vector<1x256xf32>
    %14 = vector.shape_cast %13 : vector<1x256xf32> to vector<1x1x256xf32>
    %15 = vector.extract_strided_slice %4 {offsets = [5, 0], sizes = [1, 256], strides = [1, 1]} : vector<16x256xf32> to vector<1x256xf32>
    %16 = vector.shape_cast %15 : vector<1x256xf32> to vector<1x1x256xf32>
    %17 = vector.extract_strided_slice %4 {offsets = [6, 0], sizes = [1, 256], strides = [1, 1]} : vector<16x256xf32> to vector<1x256xf32>
    %18 = vector.shape_cast %17 : vector<1x256xf32> to vector<1x1x256xf32>
    %19 = vector.extract_strided_slice %4 {offsets = [7, 0], sizes = [1, 256], strides = [1, 1]} : vector<16x256xf32> to vector<1x256xf32>
    %20 = vector.shape_cast %19 : vector<1x256xf32> to vector<1x1x256xf32>
    %21 = vector.extract_strided_slice %4 {offsets = [8, 0], sizes = [1, 256], strides = [1, 1]} : vector<16x256xf32> to vector<1x256xf32>
    %22 = vector.shape_cast %21 : vector<1x256xf32> to vector<1x1x256xf32>
    %23 = vector.extract_strided_slice %4 {offsets = [9, 0], sizes = [1, 256], strides = [1, 1]} : vector<16x256xf32> to vector<1x256xf32>
    %24 = vector.shape_cast %23 : vector<1x256xf32> to vector<1x1x256xf32>
    %25 = vector.extract_strided_slice %0 {offsets = [0, 0, 0], sizes = [2, 8, 1], strides = [1, 1, 1]} : vector<2x8x4xf32> to vector<2x8x1xf32>
    %26 = vector.extract_strided_slice %0 {offsets = [0, 0, 1], sizes = [2, 8, 1], strides = [1, 1, 1]} : vector<2x8x4xf32> to vector<2x8x1xf32>
    %27 = vector.extract_strided_slice %0 {offsets = [0, 0, 2], sizes = [2, 8, 1], strides = [1, 1, 1]} : vector<2x8x4xf32> to vector<2x8x1xf32>
    %28 = vector.extract_strided_slice %0 {offsets = [0, 0, 3], sizes = [2, 8, 1], strides = [1, 1, 1]} : vector<2x8x4xf32> to vector<2x8x1xf32>
    %29 = vector.broadcast %27 : vector<2x8x1xf32> to vector<2x8x256xf32>
    %30 = vector.broadcast %10 : vector<1x1x256xf32> to vector<2x8x256xf32>
    %31 = arith.minimumf %29, %30 : vector<2x8x256xf32>
    %32 = vector.broadcast %25 : vector<2x8x1xf32> to vector<2x8x256xf32>
    %33 = vector.broadcast %6 : vector<1x1x256xf32> to vector<2x8x256xf32>
    %34 = arith.maximumf %32, %33 : vector<2x8x256xf32>
    %35 = arith.subf %31, %34 : vector<2x8x256xf32>
    %cst = arith.constant 0.000000e+00 : f32
    %36 = vector.broadcast %cst : f32 to vector<2x8x256xf32>
    %37 = arith.maximumf %35, %36 : vector<2x8x256xf32>
    %38 = vector.broadcast %28 : vector<2x8x1xf32> to vector<2x8x256xf32>
    %39 = vector.broadcast %12 : vector<1x1x256xf32> to vector<2x8x256xf32>
    %40 = arith.minimumf %38, %39 : vector<2x8x256xf32>
    %41 = vector.broadcast %26 : vector<2x8x1xf32> to vector<2x8x256xf32>
    %42 = vector.broadcast %8 : vector<1x1x256xf32> to vector<2x8x256xf32>
    %43 = arith.maximumf %41, %42 : vector<2x8x256xf32>
    %44 = arith.subf %40, %43 : vector<2x8x256xf32>
    %cst_13 = arith.constant 0.000000e+00 : f32
    %45 = vector.broadcast %cst_13 : f32 to vector<2x8x256xf32>
    %46 = arith.maximumf %44, %45 : vector<2x8x256xf32>
    %47 = arith.mulf %37, %46 : vector<2x8x256xf32>
    %48 = arith.subf %27, %25 : vector<2x8x1xf32>
    %49 = arith.subf %28, %26 : vector<2x8x1xf32>
    %50 = arith.mulf %48, %49 : vector<2x8x1xf32>
    %51 = vector.broadcast %50 : vector<2x8x1xf32> to vector<2x8x256xf32>
    %52 = vector.broadcast %14 : vector<1x1x256xf32> to vector<2x8x256xf32>
    %53 = arith.addf %51, %52 : vector<2x8x256xf32>
    %54 = arith.subf %53, %47 : vector<2x8x256xf32>
    %cst_14 = arith.constant 9.99999996E-13 : f32
    %55 = vector.broadcast %cst_14 : f32 to vector<2x8x256xf32>
    %56 = arith.maximumf %54, %55 : vector<2x8x256xf32>
    %cst_15 = arith.constant 5.000000e-01 : f32
    %57 = vector.broadcast %cst_15 : f32 to vector<2x8x1xf32>
    %58 = arith.cmpf ogt, %2, %57 : vector<2x8x1xf32>
    %cst_16 = arith.constant 5.000000e-01 : f32
    %59 = vector.broadcast %cst_16 : f32 to vector<1x1x256xf32>
    %60 = arith.cmpf ogt, %24, %59 : vector<1x1x256xf32>
    %61 = vector.broadcast %58 : vector<2x8x1xi1> to vector<2x8x256xi1>
    %62 = vector.broadcast %60 : vector<1x1x256xi1> to vector<2x8x256xi1>
    %63 = arith.andi %61, %62 : vector<2x8x256xi1>
    %64 = arith.divf %47, %56 : vector<2x8x256xf32>
    %cst_17 = arith.constant -1.000000e+00 : f32
    %65 = vector.broadcast %cst_17 : f32 to vector<2x8x256xf32>
    %66 = arith.select %63, %64, %65 : vector<2x8x256xi1>, vector<2x8x256xf32>
    %cst_18 = arith.constant dense<0xFF800000> : vector<2x256xf32>
    %67 = vector.multi_reduction <maximumf>, %66, %cst_18 [1] : vector<2x8x256xf32> to vector<2x256xf32>
    %68 = vector.shape_cast %67 : vector<2x256xf32> to vector<2x1x256xf32>
    %cst_19 = arith.constant 5.000000e-01 : f32
    %69 = vector.broadcast %cst_19 : f32 to vector<2x1x256xf32>
    %70 = arith.cmpf oge, %68, %69 : vector<2x1x256xf32>
    %71 = tpu.iota {dimensions = array<i32: 1>} : vector<2x8x256xi32>
    %72 = vector.broadcast %68 : vector<2x1x256xf32> to vector<2x8x256xf32>
    %73 = arith.cmpf oeq, %66, %72 : vector<2x8x256xf32>
    %c8_i32 = arith.constant 8 : i32
    %74 = vector.broadcast %c8_i32 : i32 to vector<2x8x256xi32>
    %75 = arith.select %73, %71, %74 : vector<2x8x256xi1>, vector<2x8x256xi32>
    %cst_20 = arith.constant dense<2147483647> : vector<2x256xi32>
    %76 = vector.multi_reduction <minsi>, %75, %cst_20 [1] : vector<2x8x256xi32> to vector<2x256xi32>
    %77 = vector.shape_cast %76 : vector<2x256xi32> to vector<2x1x256xi32>
    %cst_21 = arith.constant dense<0xFF800000> : vector<2x8xf32>
    %78 = vector.multi_reduction <maximumf>, %66, %cst_21 [2] : vector<2x8x256xf32> to vector<2x8xf32>
    %79 = vector.shape_cast %78 : vector<2x8xf32> to vector<2x8x1xf32>
    %80 = vector.broadcast %79 : vector<2x8x1xf32> to vector<2x8x256xf32>
    %81 = arith.cmpf oeq, %66, %80 : vector<2x8x256xf32>
    %82 = arith.andi %81, %63 : vector<2x8x256xi1>
    %83 = arith.extui %82 : vector<2x8x256xi1> to vector<2x8x256xi32>
    %84 = arith.sitofp %83 : vector<2x8x256xi32> to vector<2x8x256xf32>
    %cst_22 = arith.constant dense<0xFF800000> : vector<2x256xf32>
    %85 = vector.multi_reduction <maximumf>, %84, %cst_22 [1] : vector<2x8x256xf32> to vector<2x256xf32>
    %86 = vector.shape_cast %85 : vector<2x256xf32> to vector<2x1x256xf32>
    %cst_23 = arith.constant 0.000000e+00 : f32
    %87 = vector.broadcast %cst_23 : f32 to vector<2x1x256xf32>
    %88 = arith.cmpf ogt, %86, %87 : vector<2x1x256xf32>
    %89 = arith.ori %88, %70 : vector<2x1x256xi1>
    %c0_i32 = arith.constant 0 : i32
    %90 = vector.broadcast %c0_i32 : i32 to vector<2x1x256xi32>
    %91 = arith.select %89, %77, %90 : vector<2x1x256xi1>, vector<2x1x256xi32>
    %92 = vector.broadcast %91 : vector<2x1x256xi32> to vector<2x8x256xi32>
    %93 = arith.cmpi eq, %71, %92 : vector<2x8x256xi32>
    %94 = arith.extui %93 : vector<2x8x256xi1> to vector<2x8x256xi32>
    %95 = arith.sitofp %94 : vector<2x8x256xi32> to vector<2x8x256xf32>
    "tpu.trace_start"() <{level = 10 : i32, message = "bcg,bga->bca"}> : () -> ()
    %cst_24 = arith.constant dense<0.000000e+00> : vector<2x4x256xf32>
    %96 = tpu.matmul %1, %95, %cst_24 {dimension_numbers = #tpu.dot_dimension_numbers<[2], [1], [1], [2], [0, 0, 0, 1, 1, 2], [0], [0]>} : vector<2x4x8xf32>, vector<2x8x256xf32>, vector<2x4x256xf32> -> vector<2x4x256xf32>
    "tpu.trace_stop"() : () -> ()
    %97 = vector.extract_strided_slice %96 {offsets = [0, 0, 0], sizes = [2, 1, 256], strides = [1, 1, 1]} : vector<2x4x256xf32> to vector<2x1x256xf32>
    %98 = vector.extract_strided_slice %96 {offsets = [0, 1, 0], sizes = [2, 1, 256], strides = [1, 1, 1]} : vector<2x4x256xf32> to vector<2x1x256xf32>
    %99 = vector.extract_strided_slice %96 {offsets = [0, 2, 0], sizes = [2, 1, 256], strides = [1, 1, 1]} : vector<2x4x256xf32> to vector<2x1x256xf32>
    %100 = vector.extract_strided_slice %96 {offsets = [0, 3, 0], sizes = [2, 1, 256], strides = [1, 1, 1]} : vector<2x4x256xf32> to vector<2x1x256xf32>
    %101 = arith.subf %99, %97 : vector<2x1x256xf32>
    %102 = arith.subf %100, %98 : vector<2x1x256xf32>
    %cst_25 = arith.constant 5.000000e-01 : f32
    %103 = vector.broadcast %cst_25 : f32 to vector<2x1x256xf32>
    %104 = arith.mulf %103, %101 : vector<2x1x256xf32>
    %105 = arith.addf %97, %104 : vector<2x1x256xf32>
    %cst_26 = arith.constant 5.000000e-01 : f32
    %106 = vector.broadcast %cst_26 : f32 to vector<2x1x256xf32>
    %107 = arith.mulf %106, %102 : vector<2x1x256xf32>
    %108 = arith.addf %98, %107 : vector<2x1x256xf32>
    %109 = vector.broadcast %16 : vector<1x1x256xf32> to vector<2x1x256xf32>
    %110 = arith.subf %105, %109 : vector<2x1x256xf32>
    %cst_27 = arith.constant 1.000000e+00 : f32
    %111 = vector.broadcast %cst_27 : f32 to vector<2x1x256xf32>
    %112 = arith.mulf %111, %110 : vector<2x1x256xf32>
    %113 = vector.broadcast %20 : vector<1x1x256xf32> to vector<2x1x256xf32>
    %114 = arith.mulf %112, %113 : vector<2x1x256xf32>
    %115 = vector.broadcast %18 : vector<1x1x256xf32> to vector<2x1x256xf32>
    %116 = arith.subf %108, %115 : vector<2x1x256xf32>
    %cst_28 = arith.constant 1.000000e+00 : f32
    %117 = vector.broadcast %cst_28 : f32 to vector<2x1x256xf32>
    %118 = arith.mulf %117, %116 : vector<2x1x256xf32>
    %119 = vector.broadcast %22 : vector<1x1x256xf32> to vector<2x1x256xf32>
    %120 = arith.mulf %118, %119 : vector<2x1x256xf32>
    %121 = vector.broadcast %20 : vector<1x1x256xf32> to vector<2x1x256xf32>
    %122 = arith.mulf %101, %121 : vector<2x1x256xf32>
    %123 = math.log %122 : vector<2x1x256xf32>
    %cst_29 = arith.constant 1.000000e+00 : f32
    %124 = vector.broadcast %cst_29 : f32 to vector<2x1x256xf32>
    %125 = arith.mulf %124, %123 : vector<2x1x256xf32>
    %126 = vector.broadcast %22 : vector<1x1x256xf32> to vector<2x1x256xf32>
    %127 = arith.mulf %102, %126 : vector<2x1x256xf32>
    %128 = math.log %127 : vector<2x1x256xf32>
    %cst_30 = arith.constant 1.000000e+00 : f32
    %129 = vector.broadcast %cst_30 : f32 to vector<2x1x256xf32>
    %130 = arith.mulf %129, %128 : vector<2x1x256xf32>
    %131 = vector.extract_strided_slice %3 {offsets = [0, 0, 0], sizes = [2, 1, 256], strides = [1, 1, 1]} : vector<2x4x256xf32> to vector<2x1x256xf32>
    %132 = arith.subf %131, %114 : vector<2x1x256xf32>
    %133 = math.absf %132 : vector<2x1x256xf32>
    %134 = vector.extract_strided_slice %3 {offsets = [0, 1, 0], sizes = [2, 1, 256], strides = [1, 1, 1]} : vector<2x4x256xf32> to vector<2x1x256xf32>
    %135 = arith.subf %134, %120 : vector<2x1x256xf32>
    %136 = math.absf %135 : vector<2x1x256xf32>
    %137 = arith.addf %133, %136 : vector<2x1x256xf32>
    %138 = vector.extract_strided_slice %3 {offsets = [0, 2, 0], sizes = [2, 1, 256], strides = [1, 1, 1]} : vector<2x4x256xf32> to vector<2x1x256xf32>
    %139 = arith.subf %138, %125 : vector<2x1x256xf32>
    %140 = math.absf %139 : vector<2x1x256xf32>
    %141 = arith.addf %137, %140 : vector<2x1x256xf32>
    %142 = vector.extract_strided_slice %3 {offsets = [0, 3, 0], sizes = [2, 1, 256], strides = [1, 1, 1]} : vector<2x4x256xf32> to vector<2x1x256xf32>
    %143 = arith.subf %142, %130 : vector<2x1x256xf32>
    %144 = math.absf %143 : vector<2x1x256xf32>
    %145 = arith.addf %141, %144 : vector<2x1x256xf32>
    %cst_31 = arith.constant 0.000000e+00 : f32
    %146 = vector.broadcast %cst_31 : f32 to vector<2x1x256xf32>
    %147 = arith.select %89, %145, %146 : vector<2x1x256xi1>, vector<2x1x256xf32>
    %cst_32 = arith.constant dense<0.000000e+00> : vector<2x1xf32>
    %148 = vector.multi_reduction <add>, %147, %cst_32 [2] : vector<2x1x256xf32> to vector<2x1xf32>
    %149 = vector.shape_cast %148 : vector<2x1xf32> to vector<2x1x1xf32>
    %150 = arith.extui %89 : vector<2x1x256xi1> to vector<2x1x256xi32>
    %151 = arith.sitofp %150 : vector<2x1x256xi32> to vector<2x1x256xf32>
    %cst_33 = arith.constant dense<0.000000e+00> : vector<2x1xf32>
    %152 = vector.multi_reduction <add>, %151, %cst_33 [2] : vector<2x1x256xf32> to vector<2x1xf32>
    %153 = vector.shape_cast %152 : vector<2x1xf32> to vector<2x1x1xf32>
    %154 = tpu.concatenate %149, %153 in 1 : vector<2x1x1xf32>, vector<2x1x1xf32> -> vector<2x2x1xf32>
    %155 = vector.shape_cast %154 : vector<2x2x1xf32> to vector<2x2x1xf32>
    %156 = vector.broadcast %155 : vector<2x2x1xf32> to vector<2x2x128xf32>
    %c0_34 = arith.constant 0 : index
    %c0_35 = arith.constant 0 : index
    %c0_36 = arith.constant 0 : index
    %157 = vector.load %arg6[%c0_34, %c0_35, %c0_36] : memref<2x2x128xf32, #tpu.memory_space<vmem>>, vector<2x2x128xf32>
    tpu.vector_store %arg6[%c0_34, %c0_35, %c0_36], %156 {strides = array<i32>} : memref<2x2x128xf32, #tpu.memory_space<vmem>>, vector<2x2x128xf32>,
    return
  }
  func.func @transform_0(%arg0: i32) -> (i32, i32, i32) {
    %c0_i32 = arith.constant 0 : i32
    %c0_i32_0 = arith.constant 0 : i32
    %c0_i32_1 = arith.constant 0 : i32
    return %arg0, %c0_i32, %c0_i32_0 : i32, i32, i32
  }
  func.func @transform_1(%arg0: i32) -> (i32, i32, i32) {
    %c0_i32 = arith.constant 0 : i32
    %c0_i32_0 = arith.constant 0 : i32
    %c0_i32_1 = arith.constant 0 : i32
    return %arg0, %c0_i32, %c0_i32_0 : i32, i32, i32
  }
  func.func @transform_2(%arg0: i32) -> (i32, i32, i32) {
    %c0_i32 = arith.constant 0 : i32
    %c0_i32_0 = arith.constant 0 : i32
    %c0_i32_1 = arith.constant 0 : i32
    return %arg0, %c0_i32, %c0_i32_0 : i32, i32, i32
  }
  func.func @transform_3(%arg0: i32) -> (i32, i32, i32) {
    %c0_i32 = arith.constant 0 : i32
    %c0_i32_0 = arith.constant 0 : i32
    %c0_i32_1 = arith.constant 0 : i32
    return %arg0, %c0_i32, %c0_i32_0 : i32, i32, i32
  }
  func.func @transform_4(%arg0: i32) -> (i32, i32) {
    %c0_i32 = arith.constant 0 : i32
    %c0_i32_0 = arith.constant 0 : i32
    %c0_i32_1 = arith.constant 0 : i32
    return %c0_i32, %c0_i32_0 : i32, i32
  }
  func.func @transform_5(%arg0: i32) -> (i32, i32, i32) {
    %c0_i32 = arith.constant 0 : i32
    %c0_i32_0 = arith.constant 0 : i32
    %c0_i32_1 = arith.constant 0 : i32
    return %arg0, %c0_i32, %c0_i32_0 : i32, i32, i32
  }
}

</mosaic_0001>

<llo_original>
// kernel: set_criterion_loss.1
$region0: #{set_criterion_loss.1}
  #allocation0 [shape = 'u32[]', space=smem, size = 0x4, offset = 0x4, fixed_abs, tag = 'smem constant byte address 0x4 - core index']
  #allocation1 [shape = 'u32[144,128]{1,0:T(1,128)}', space=vmem, size = 0x12000, scoped, tag = 'internal scratch']
  %s0 = inlined_call_operand.vmem [shape: f32[2,8,4], index: 0, kind: input, shape index: {}]
  %s1 = inlined_call_operand.vmem [shape: f32[2,4,8], index: 1, kind: input, shape index: {}]
  %s2 = inlined_call_operand.vmem [shape: f32[2,8,1], index: 2, kind: input, shape index: {}]
  %s3 = inlined_call_operand.vmem [shape: f32[2,4,256], index: 3, kind: input, shape index: {}]
  %s4 = inlined_call_operand.vmem [shape: f32[16,256], index: 4, kind: input, shape index: {}]
  %s5 = inlined_call_operand.vmem [shape: f32[2,2,128], index: 5, kind: output, shape index: {}]
  %s6 = sld [smem:[#allocation0]]
  $region30: #{set_criterion_loss.1} parent=0
    _
  %s8 = ssub.s32 1, %s6
  %s9 = scalar_select 0, %s8, %s6
  // Predicated region
  $region2: #{set_criterion_loss.1} parent=0 // pred_check
    _
  $region3: #{set_criterion_loss.1} parent=0 // pred_check_branch
    %11 = sbr.rel (0) target = $region5
  $region4: #{set_criterion_loss.1} parent=0 // pred_region
    _
  $region5: #{set_criterion_loss.1} parent=0 // pred_fallthru
    _
  // Predicated region
  $region6: #{set_criterion_loss.1} parent=0 // pred_check
    _
  $region7: #{set_criterion_loss.1} parent=0 // pred_check_branch
    %13 = sbr.rel (0) target = $region9
  $region8: #{set_criterion_loss.1} parent=0 // pred_region
    _
  $region9: #{set_criterion_loss.1} parent=0 // pred_fallthru
    _
  // Predicated region
  $region10: #{set_criterion_loss.1} parent=0 // pred_check
    _
  $region11: #{set_criterion_loss.1} parent=0 // pred_check_branch
    %15 = sbr.rel (0) target = $region13
  $region12: #{set_criterion_loss.1} parent=0 // pred_region
    _
  $region13: #{set_criterion_loss.1} parent=0 // pred_fallthru
    _
  // Predicated region
  $region14: #{set_criterion_loss.1} parent=0 // pred_check
    _
  $region15: #{set_criterion_loss.1} parent=0 // pred_check_branch
    %17 = sbr.rel (0) target = $region17
  $region16: #{set_criterion_loss.1} parent=0 // pred_region
    _
  $region17: #{set_criterion_loss.1} parent=0 // pred_fallthru
    _
  // Predicated region
  $region18: #{set_criterion_loss.1} parent=0 // pred_check
    _
  $region19: #{set_criterion_loss.1} parent=0 // pred_check_branch
    %19 = sbr.rel (0) target = $region21
  $region20: #{set_criterion_loss.1} parent=0 // pred_region
    _
  $region21: #{set_criterion_loss.1} parent=0 // pred_fallthru
    _
  %v20 = vld [vmem:[%s0] sm:$0xff]
  %v21 = vld [vmem:[%s0 + $0x8] sm:$0xff]
  %v22 = vld [vmem:[%s1] sm:$0xf]
  %v23 = vld [vmem:[%s1 + $0x4] sm:$0xf]
  %v24 = vld [vmem:[%s2] sm:$0xff]
  %v25 = vld [vmem:[%s2 + $0x8] sm:$0xff]
  %v26 = vld [vmem:[%s3] sm:$0xff]
  %v27 = vld [vmem:[%s3 + $0x8] sm:$0xff]
  %v28 = vld [vmem:[%s4] sm:$0xff]
  %v29 = vld [vmem:[%s4 + $0x8] sm:$0xff]
  %v30 = vld [vmem:[%s4 + $0x10] sm:$0xff]
  %v31 = vld [vmem:[%s4 + $0x18] sm:$0xff]
  %33 = vset.pattern.permute.xlu0 2
  %34 = vperm.xlu0 %33, %v20
  %v35 = vpop.permute.xlu0 %34
  %38 = vset.pattern.permute.xlu0 2
  %39 = vperm.xlu0 %38, %v21
  %v40 = vpop.permute.xlu0 %39
  %v42 = vlaneseq
  %v43 = vshrl.u32 %v42, 7
  %v44 = vsub.s32 2, %v43
  %v45 = vrot.slane %v28, %v44
  %v46 = vlaneseq
  %v47 = vshrl.u32 %v46, 7
  %v48 = vsub.s32 2, %v47
  %v49 = vrot.slane %v29, %v48
  %v50 = vmin.f32 %v35, %v45
  %v51 = vmin.f32 %v35, %v49
  %v52 = vmin.f32 %v40, %v45
  %v53 = vmin.f32 %v40, %v49
  %54 = vset.pattern.permute.xlu0 0
  %55 = vperm.xlu0 %54, %v20
  %v56 = vpop.permute.xlu0 %55
  %58 = vset.pattern.permute.xlu0 0
  %59 = vperm.xlu0 %58, %v21
  %v60 = vpop.permute.xlu0 %59
  %v62 = vlaneseq
  %v63 = vshrl.u32 %v62, 7
  %v64 = vsub.s32 0, %v63
  %v65 = vrot.slane %v28, %v64
  %v66 = vlaneseq
  %v67 = vshrl.u32 %v66, 7
  %v68 = vsub.s32 0, %v67
  %v69 = vrot.slane %v29, %v68
  %v70 = vmax.f32 %v56, %v65
  %v71 = vmax.f32 %v56, %v69
  %v72 = vmax.f32 %v60, %v65
  %v73 = vmax.f32 %v60, %v69
  %v74 = vsub.f32 %v50, %v70
  %v75 = vsub.f32 %v51, %v71
  %v76 = vsub.f32 %v52, %v72
  %v77 = vsub.f32 %v53, %v73
  %v78 = vmax.f32 %v74, 0.0
  %v79 = vmax.f32 %v75, 0.0
  %v80 = vmax.f32 %v76, 0.0
  %v81 = vmax.f32 %v77, 0.0
  %82 = vset.pattern.permute.xlu0 3
  %83 = vperm.xlu0 %82, %v20
  %v84 = vpop.permute.xlu0 %83
  %86 = vset.pattern.permute.xlu0 3
  %87 = vperm.xlu0 %86, %v21
  %v88 = vpop.permute.xlu0 %87
  %v90 = vlaneseq
  %v91 = vshrl.u32 %v90, 7
  %v92 = vsub.s32 3, %v91
  %v93 = vrot.slane %v28, %v92
  %v94 = vlaneseq
  %v95 = vshrl.u32 %v94, 7
  %v96 = vsub.s32 3, %v95
  %v97 = vrot.slane %v29, %v96
  %v98 = vmin.f32 %v84, %v93
  %v99 = vmin.f32 %v84, %v97
  %v100 = vmin.f32 %v88, %v93
  %v101 = vmin.f32 %v88, %v97
  %102 = vset.pattern.permute.xlu0 1
  %103 = vperm.xlu0 %102, %v20
  %v104 = vpop.permute.xlu0 %103
  %106 = vset.pattern.permute.xlu0 1
  %107 = vperm.xlu0 %106, %v21
  %v108 = vpop.permute.xlu0 %107
  %v110 = vlaneseq
  %v111 = vshrl.u32 %v110, 7
  %v112 = vsub.s32 1, %v111
  %v113 = vrot.slane %v28, %v112
  %v114 = vlaneseq
  %v115 = vshrl.u32 %v114, 7
  %v116 = vsub.s32 1, %v115
  %v117 = vrot.slane %v29, %v116
  %v118 = vmax.f32 %v104, %v113
  %v119 = vmax.f32 %v104, %v117
  %v120 = vmax.f32 %v108, %v113
  %v121 = vmax.f32 %v108, %v117
  %v122 = vsub.f32 %v98, %v118
  %v123 = vsub.f32 %v99, %v119
  %v124 = vsub.f32 %v100, %v120
  %v125 = vsub.f32 %v101, %v121
  %v126 = vmax.f32 %v122, 0.0
  %v127 = vmax.f32 %v123, 0.0
  %v128 = vmax.f32 %v124, 0.0
  %v129 = vmax.f32 %v125, 0.0
  %v130 = vmul.f32 %v78, %v126
  %v131 = vmul.f32 %v79, %v127
  %v132 = vmul.f32 %v80, %v128
  %v133 = vmul.f32 %v81, %v129
  %134 = vrot.lane.b32.xlu0 %v20, 2
  %v135 = vpop.permute.xlu0 %134
  %136 = vrot.lane.b32.xlu0 %v21, 2
  %v137 = vpop.permute.xlu0 %136
  %v140 = vsub.f32 %v20, %v135
  %v141 = vsub.f32 %v21, %v137
  %144 = vrot.lane.b32.xlu0 %v140, 127
  %v145 = vpop.permute.xlu0 %144
  %146 = vrot.lane.b32.xlu0 %v141, 127
  %v147 = vpop.permute.xlu0 %146
  %v150 = vmul.f32 %v140, %v145
  %v151 = vmul.f32 %v141, %v147
  %153 = vset.pattern.permute.xlu0 2
  %154 = vperm.xlu0 %153, %v150
  %v155 = vpop.permute.xlu0 %154
  %158 = vset.pattern.permute.xlu0 2
  %159 = vperm.xlu0 %158, %v151
  %v160 = vpop.permute.xlu0 %159
  %v162 = vlaneseq
  %v163 = vshrl.u32 %v162, 7
  %v164 = vsub.s32 4, %v163
  %v165 = vrot.slane %v28, %v164
  %v166 = vlaneseq
  %v167 = vshrl.u32 %v166, 7
  %v168 = vsub.s32 4, %v167
  %v169 = vrot.slane %v29, %v168
  %v170 = vadd.f32 %v155, %v165
  %v171 = vadd.f32 %v155, %v169
  %v172 = vadd.f32 %v160, %v165
  %v173 = vadd.f32 %v160, %v169
  %v174 = vsub.f32 %v170, %v130
  %v175 = vsub.f32 %v171, %v131
  %v176 = vsub.f32 %v172, %v132
  %v177 = vsub.f32 %v173, %v133
  %v178 = vmax.f32 %v174, 1e-12
  %v179 = vmax.f32 %v175, 1e-12
  %v180 = vmax.f32 %v176, 1e-12
  %v181 = vmax.f32 %v177, 1e-12
  %vm182 = vcmp.gt.f32.partialorder %v24, 0.5
  %vm183 = vcmp.gt.f32.partialorder %v25, 0.5
  %vm184 = vcmp.gt.f32.partialorder %v30, 0.5
  %vm185 = vcmp.gt.f32.partialorder %v31, 0.5
  %v186 = vsel %vm182, 1, 0
  %v187 = vsel %vm183, 1, 0
  %188 = vset.pattern.permute.xlu0 0
  %189 = vperm.xlu0 %188, %v186
  %v190 = vpop.permute.xlu0 %189
  %191 = vset.pattern.permute.xlu0 0
  %192 = vperm.xlu0 %191, %v187
  %v193 = vpop.permute.xlu0 %192
  %vm194 = vcmp.eq.s32.totalorder %v190, 1
  %vm195 = vcmp.eq.s32.totalorder %v193, 1
  %v196 = vsel %vm184, 1, 0
  %v197 = vsel %vm185, 1, 0
  %v198 = vlaneseq
  %v199 = vshrl.u32 %v198, 7
  %v200 = vsub.s32 1, %v199
  %v201 = vrot.slane %v196, %v200
  %v202 = vlaneseq
  %v203 = vshrl.u32 %v202, 7
  %v204 = vsub.s32 1, %v203
  %v205 = vrot.slane %v197, %v204
  %vm206 = vcmp.eq.s32.totalorder %v201, 1
  %vm207 = vcmp.eq.s32.totalorder %v205, 1
  %vm208 = vmand %vm194, %vm206
  %vm209 = vmand %vm194, %vm207
  %vm210 = vmand %vm195, %vm206
  %vm211 = vmand %vm195, %vm207
  %v212 = vrcp.pop %v178
  %v213 = vmul.f32 %v130, %v212
  %v214 = vrcp.pop %v179
  %v215 = vmul.f32 %v131, %v214
  %v216 = vrcp.pop %v180
  %v217 = vmul.f32 %v132, %v216
  %v218 = vrcp.pop %v181
  %v219 = vmul.f32 %v133, %v218
  %v220 = vsel %vm208, %v213, -1.0
  %v221 = vsel %vm209, %v215, -1.0
  %v222 = vsel %vm210, %v217, -1.0
  %v223 = vsel %vm211, %v219, -1.0
  %v224 = vrot.slane %v220, 4
  %v225 = vmax.f32 %v220, %v224
  %v226 = vrot.slane %v225, 2
  %v227 = vmax.f32 %v225, %v226
  %v228 = vrot.slane %v227, 1
  %v229 = vmax.f32 %v227, %v228
  %v230 = vrot.slane %v221, 4
  %v231 = vmax.f32 %v221, %v230
  %v232 = vrot.slane %v231, 2
  %v233 = vmax.f32 %v231, %v232
  %v234 = vrot.slane %v233, 1
  %v235 = vmax.f32 %v233, %v234
  %v236 = vrot.slane %v222, 4
  %v237 = vmax.f32 %v222, %v236
  %v238 = vrot.slane %v237, 2
  %v239 = vmax.f32 %v237, %v238
  %v240 = vrot.slane %v239, 1
  %v241 = vmax.f32 %v239, %v240
  %v242 = vrot.slane %v223, 4
  %v243 = vmax.f32 %v223, %v242
  %v244 = vrot.slane %v243, 2
  %v245 = vmax.f32 %v243, %v244
  %v246 = vrot.slane %v245, 1
  %v247 = vmax.f32 %v245, %v246
  %vm248 = vcmp.ge.f32.partialorder %v229, 0.5
  %vm249 = vcmp.ge.f32.partialorder %v235, 0.5
  %vm250 = vcmp.ge.f32.partialorder %v241, 0.5
  %vm251 = vcmp.ge.f32.partialorder %v247, 0.5
  %v252 = vlaneseq
  %v253 = vshrl.u32 %v252, 7
  %vm254 = vcmp.eq.f32.partialorder %v220, %v229
  %vm255 = vcmp.eq.f32.partialorder %v221, %v235
  %vm256 = vcmp.eq.f32.partialorder %v222, %v241
  %vm257 = vcmp.eq.f32.partialorder %v223, %v247
  %v258 = vsel %vm254, %v253, 8
  %v259 = vsel %vm255, %v253, 8
  %v260 = vsel %vm256, %v253, 8
  %v261 = vsel %vm257, %v253, 8
  %v262 = vrot.slane %v258, 4
  %vm263 = vcmp.lt.s32.totalorder %v258, %v262
  %v264 = vsel %vm263, %v258, %v262
  %v265 = vrot.slane %v264, 2
  %vm266 = vcmp.lt.s32.totalorder %v264, %v265
  %v267 = vsel %vm266, %v264, %v265
  %v268 = vrot.slane %v267, 1
  %vm269 = vcmp.lt.s32.totalorder %v267, %v268
  %v270 = vsel %vm269, %v267, %v268
  %v271 = vrot.slane %v259, 4
  %vm272 = vcmp.lt.s32.totalorder %v259, %v271
  %v273 = vsel %vm272, %v259, %v271
  %v274 = vrot.slane %v273, 2
  %vm275 = vcmp.lt.s32.totalorder %v273, %v274
  %v276 = vsel %vm275, %v273, %v274
  %v277 = vrot.slane %v276, 1
  %vm278 = vcmp.lt.s32.totalorder %v276, %v277
  %v279 = vsel %vm278, %v276, %v277
  %v280 = vrot.slane %v260, 4
  %vm281 = vcmp.lt.s32.totalorder %v260, %v280
  %v282 = vsel %vm281, %v260, %v280
  %v283 = vrot.slane %v282, 2
  %vm284 = vcmp.lt.s32.totalorder %v282, %v283
  %v285 = vsel %vm284, %v282, %v283
  %v286 = vrot.slane %v285, 1
  %vm287 = vcmp.lt.s32.totalorder %v285, %v286
  %v288 = vsel %vm287, %v285, %v286
  %v289 = vrot.slane %v261, 4
  %vm290 = vcmp.lt.s32.totalorder %v261, %v289
  %v291 = vsel %vm290, %v261, %v289
  %v292 = vrot.slane %v291, 2
  %vm293 = vcmp.lt.s32.totalorder %v291, %v292
  %v294 = vsel %vm293, %v291, %v292
  %v295 = vrot.slane %v294, 1
  %vm296 = vcmp.lt.s32.totalorder %v294, %v295
  %v297 = vsel %vm296, %v294, %v295
  %v298 = vmax.f32 %v220, %v221
  %299 = vmax.xlane.f32.xlu0 %v298
  %v300 = vpop.xlane.xlu0 %299
  %v301 = vmax.f32 %v222, %v223
  %302 = vmax.xlane.f32.xlu0 %v301
  %v303 = vpop.xlane.xlu0 %302
  %vm304 = vcmp.eq.f32.partialorder %v220, %v300
  %vm305 = vcmp.eq.f32.partialorder %v221, %v300
  %vm306 = vcmp.eq.f32.partialorder %v222, %v303
  %vm307 = vcmp.eq.f32.partialorder %v223, %v303
  %vm308 = vmand %vm304, %vm208
  %vm309 = vmand %vm305, %vm209
  %vm310 = vmand %vm306, %vm210
  %vm311 = vmand %vm307, %vm211
  %v312 = vsel %vm308, 1, 0
  %v313 = vsel %vm309, 1, 0
  %v314 = vsel %vm310, 1, 0
  %v315 = vsel %vm311, 1, 0
  %v316 = vcvt.s32.f32 %v312
  %v317 = vcvt.s32.f32 %v313
  %v318 = vcvt.s32.f32 %v314
  %v319 = vcvt.s32.f32 %v315
  %v320 = vrot.slane %v316, 4
  %v321 = vmax.f32 %v316, %v320
  %v322 = vrot.slane %v321, 2
  %v323 = vmax.f32 %v321, %v322
  %v324 = vrot.slane %v323, 1
  %v325 = vmax.f32 %v323, %v324
  %v326 = vrot.slane %v317, 4
  %v327 = vmax.f32 %v317, %v326
  %v328 = vrot.slane %v327, 2
  %v329 = vmax.f32 %v327, %v328
  %v330 = vrot.slane %v329, 1
  %v331 = vmax.f32 %v329, %v330
  %v332 = vrot.slane %v318, 4
  %v333 = vmax.f32 %v318, %v332
  %v334 = vrot.slane %v333, 2
  %v335 = vmax.f32 %v333, %v334
  %v336 = vrot.slane %v335, 1
  %v337 = vmax.f32 %v335, %v336
  %v338 = vrot.slane %v319, 4
  %v339 = vmax.f32 %v319, %v338
  %v340 = vrot.slane %v339, 2
  %v341 = vmax.f32 %v339, %v340
  %v342 = vrot.slane %v341, 1
  %v343 = vmax.f32 %v341, %v342
  %vm344 = vcmp.gt.f32.partialorder %v325, 0.0
  %vm345 = vcmp.gt.f32.partialorder %v331, 0.0
  %vm346 = vcmp.gt.f32.partialorder %v337, 0.0
  %vm347 = vcmp.gt.f32.partialorder %v343, 0.0
  %vm348 = vmor %vm344, %vm248
  %vm349 = vmor %vm345, %vm249
  %vm350 = vmor %vm346, %vm250
  %vm351 = vmor %vm347, %vm251
  %v352 = vsel %vm348, %v270, 0
  %v353 = vsel %vm349, %v279, 0
  %v354 = vsel %vm350, %v288, 0
  %v355 = vsel %vm351, %v297, 0
  %vm356 = vcmp.eq.s32.totalorder %v253, %v352
  %vm357 = vcmp.eq.s32.totalorder %v253, %v353
  %vm358 = vcmp.eq.s32.totalorder %v253, %v354
  %vm359 = vcmp.eq.s32.totalorder %v253, %v355
  %v360 = vsel %vm356, 1, 0
  %v361 = vsel %vm357, 1, 0
  %v362 = vsel %vm358, 1, 0
  %v363 = vsel %vm359, 1, 0
  %v364 = vcvt.s32.f32 %v360
  %v365 = vcvt.s32.f32 %v361
  %v366 = vcvt.s32.f32 %v362
  %v367 = vcvt.s32.f32 %v363
  %vm368 = vcmask 64512
  %v370 = vsel %vm368, %v22, 0
  %372 = vmatprep.subr.mxu0 %v365
  %373 = vmatpush1.msra.mxu0 %v364
  %374 = vmatprep.subr.mxu0 0.0
  %375 = vmatpush1.msra.mxu0 0.0
  %376 = vmatprep.subr.mxu0 0.0
  %377 = vmatpush1.msra.mxu0 0.0
  %378 = vmatprep.subr.mxu0 0.0
  %379 = vmatpush1.msra.mxu0 0.0
  %380 = vmatprep.subr.mxu0 0.0
  %381 = vmatpush1.msra.mxu0 0.0
  %382 = vmatprep.subr.mxu0 0.0
  %383 = vmatpush1.msra.mxu0 0.0
  %384 = vmatprep.subr.mxu0 0.0
  %385 = vmatpush1.msra.mxu0 0.0
  %386 = vmatprep.subr.mxu0 0.0
  %387 = vmatpush1.msra.mxu0 0.0
  %388 = vmatprep.subr.mxu0 0.0
  %389 = vmatpush1.msra.mxu0 0.0
  %390 = vmatprep.subr.mxu0 0.0
  %391 = vmatpush1.msra.mxu0 0.0
  %392 = vmatprep.subr.mxu0 0.0
  %393 = vmatpush1.msra.mxu0 0.0
  %394 = vmatprep.subr.mxu0 0.0
  %395 = vmatpush1.msra.mxu0 0.0
  %396 = vmatprep.subr.mxu0 0.0
  %397 = vmatpush1.msra.mxu0 0.0
  %398 = vmatprep.subr.mxu0 0.0
  %399 = vmatpush1.msra.mxu0 0.0
  %400 = vmatprep.subr.mxu0 0.0
  %401 = vmatpush1.msra.mxu0 0.0
  %402 = vmatprep.subr.mxu0 0.0
  %403 = vmatpush1.msra.mxu0 0.0
  %404 = vmatprep.subr.mxu0 0.0
  %405 = vmatpush1.msra.mxu0 0.0
  %406 = vmatprep.subr.mxu0 0.0
  %407 = vmatpush1.msra.mxu0 0.0
  %408 = vmatprep.subr.mxu0 0.0
  %409 = vmatpush1.msra.mxu0 0.0
  %410 = vmatprep.subr.mxu0 0.0
  %411 = vmatpush1.msra.mxu0 0.0
  %412 = vmatprep.subr.mxu0 0.0
  %413 = vmatpush1.msra.mxu0 0.0
  %414 = vmatprep.subr.mxu0 0.0
  %415 = vmatpush1.msra.mxu0 0.0
  %416 = vmatprep.subr.mxu0 0.0
  %417 = vmatpush1.msra.mxu0 0.0
  %418 = vmatprep.subr.mxu0 0.0
  %419 = vmatpush1.msra.mxu0 0.0
  %420 = vmatprep.subr.mxu0 0.0
  %421 = vmatpush1.msra.mxu0 0.0
  %422 = vmatprep.subr.mxu0 0.0
  %423 = vmatpush1.msra.mxu0 0.0
  %424 = vmatprep.subr.mxu0 0.0
  %425 = vmatpush1.msra.mxu0 0.0
  %426 = vmatprep.subr.mxu0 0.0
  %427 = vmatpush1.msra.mxu0 0.0
  %428 = vmatprep.subr.mxu0 0.0
  %429 = vmatpush1.msra.mxu0 0.0
  %430 = vmatprep.subr.mxu0 0.0
  %431 = vmatpush1.msra.mxu0 0.0
  %432 = vmatprep.subr.mxu0 0.0
  %433 = vmatpush1.msra.mxu0 0.0
  %434 = vmatprep.subr.mxu0 0.0
  %435 = vmatpush1.msra.mxu0 0.0
  %436 = vmatprep.mubr.f32.mxu0 0.0
  %437 = vmatmul.mubr.f32.gmra.mrb[0].mxu0 %v370
  %v438 = vpop.f32.mrb[0].mxu0
  %v439 = vadd.f32 0.0, %v438
  %v440 = vpop.f32.mrb[0].mxu0
  %v441 = vadd.f32 0.0, %v440
  %442 = vdwg.mxu0
  %v444 = vsel %vm368, %v23, 0
  %446 = vmatprep.subr.mxu0 %v367
  %447 = vmatpush1.msra.mxu0 %v366
  %448 = vmatprep.subr.mxu0 0.0
  %449 = vmatpush1.msra.mxu0 0.0
  %450 = vmatprep.subr.mxu0 0.0
  %451 = vmatpush1.msra.mxu0 0.0
  %452 = vmatprep.subr.mxu0 0.0
  %453 = vmatpush1.msra.mxu0 0.0
  %454 = vmatprep.subr.mxu0 0.0
  %455 = vmatpush1.msra.mxu0 0.0
  %456 = vmatprep.subr.mxu0 0.0
  %457 = vmatpush1.msra.mxu0 0.0
  %458 = vmatprep.subr.mxu0 0.0
  %459 = vmatpush1.msra.mxu0 0.0
  %460 = vmatprep.subr.mxu0 0.0
  %461 = vmatpush1.msra.mxu0 0.0
  %462 = vmatprep.subr.mxu0 0.0
  %463 = vmatpush1.msra.mxu0 0.0
  %464 = vmatprep.subr.mxu0 0.0
  %465 = vmatpush1.msra.mxu0 0.0
  %466 = vmatprep.subr.mxu0 0.0
  %467 = vmatpush1.msra.mxu0 0.0
  %468 = vmatprep.subr.mxu0 0.0
  %469 = vmatpush1.msra.mxu0 0.0
  %470 = vmatprep.subr.mxu0 0.0
  %471 = vmatpush1.msra.mxu0 0.0
  %472 = vmatprep.subr.mxu0 0.0
  %473 = vmatpush1.msra.mxu0 0.0
  %474 = vmatprep.subr.mxu0 0.0
  %475 = vmatpush1.msra.mxu0 0.0
  %476 = vmatprep.subr.mxu0 0.0
  %477 = vmatpush1.msra.mxu0 0.0
  %478 = vmatprep.subr.mxu0 0.0
  %479 = vmatpush1.msra.mxu0 0.0
  %480 = vmatprep.subr.mxu0 0.0
  %481 = vmatpush1.msra.mxu0 0.0
  %482 = vmatprep.subr.mxu0 0.0
  %483 = vmatpush1.msra.mxu0 0.0
  %484 = vmatprep.subr.mxu0 0.0
  %485 = vmatpush1.msra.mxu0 0.0
  %486 = vmatprep.subr.mxu0 0.0
  %487 = vmatpush1.msra.mxu0 0.0
  %488 = vmatprep.subr.mxu0 0.0
  %489 = vmatpush1.msra.mxu0 0.0
  %490 = vmatprep.subr.mxu0 0.0
  %491 = vmatpush1.msra.mxu0 0.0
  %492 = vmatprep.subr.mxu0 0.0
  %493 = vmatpush1.msra.mxu0 0.0
  %494 = vmatprep.subr.mxu0 0.0
  %495 = vmatpush1.msra.mxu0 0.0
  %496 = vmatprep.subr.mxu0 0.0
  %497 = vmatpush1.msra.mxu0 0.0
  %498 = vmatprep.subr.mxu0 0.0
  %499 = vmatpush1.msra.mxu0 0.0
  %500 = vmatprep.subr.mxu0 0.0
  %501 = vmatpush1.msra.mxu0 0.0
  %502 = vmatprep.subr.mxu0 0.0
  %503 = vmatpush1.msra.mxu0 0.0
  %504 = vmatprep.subr.mxu0 0.0
  %505 = vmatpush1.msra.mxu0 0.0
  %506 = vmatprep.subr.mxu0 0.0
  %507 = vmatpush1.msra.mxu0 0.0
  %508 = vmatprep.subr.mxu0 0.0
  %509 = vmatpush1.msra.mxu0 0.0
  %510 = vmatprep.mubr.f32.mxu0 0.0
  %511 = vmatmul.mubr.f32.gmra.mrb[0].mxu0 %v444
  %v512 = vpop.f32.mrb[0].mxu0
  %v513 = vadd.f32 0.0, %v512
  %v514 = vpop.f32.mrb[0].mxu0
  %v515 = vadd.f32 0.0, %v514
  %516 = vdwg.mxu0
  %v521 = vrot.slane %v439, 6
  %v522 = vrot.slane %v441, 6
  %v523 = vrot.slane %v513, 6
  %v524 = vrot.slane %v515, 6
  %v529 = vsub.f32 %v439, %v521
  %v530 = vsub.f32 %v441, %v522
  %v531 = vsub.f32 %v513, %v523
  %v532 = vsub.f32 %v515, %v524
  %v533 = vmul.f32 %v529, 0.5
  %v534 = vmul.f32 %v530, 0.5
  %v535 = vmul.f32 %v531, 0.5
  %v536 = vmul.f32 %v532, 0.5
  %v541 = vrot.slane %v533, 2
  %v542 = vrot.slane %v534, 2
  %v543 = vrot.slane %v535, 2
  %v544 = vrot.slane %v536, 2
  %v549 = vadd.f32 %v439, %v541
  %v550 = vadd.f32 %v441, %v542
  %v551 = vadd.f32 %v513, %v543
  %v552 = vadd.f32 %v515, %v544
  %v555 = vrot.slane %v28, 5
  %v556 = vrot.slane %v29, 5
  %v559 = vsub.f32 %v549, %v555
  %v560 = vsub.f32 %v550, %v556
  %v561 = vsub.f32 %v551, %v555
  %v562 = vsub.f32 %v552, %v556
  %v563 = vrot.slane %v28, 7
  %v564 = vrot.slane %v29, 7
  %v567 = vmul.f32 %v559, %v563
  %v568 = vmul.f32 %v560, %v564
  %v569 = vmul.f32 %v561, %v563
  %v570 = vmul.f32 %v562, %v564
  %v573 = vrot.slane %v30, 7
  %v574 = vrot.slane %v31, 7
  %v577 = vmul.f32 %v559, %v573
  %v578 = vmul.f32 %v560, %v574
  %v579 = vmul.f32 %v561, %v573
  %v580 = vmul.f32 %v562, %v574
  %v581 = vmul.f32 %v529, %v555
  %v582 = vmul.f32 %v530, %v556
  %v583 = vmul.f32 %v531, %v555
  %v584 = vmul.f32 %v532, %v556
  %v585 = vlog2.pop %v581
  %v586 = vmul.f32 %v585, 0.6931472
  %v587 = vlog2.pop %v582
  %v588 = vmul.f32 %v587, 0.6931472
  %v589 = vlog2.pop %v583
  %v590 = vmul.f32 %v589, 0.6931472
  %v591 = vlog2.pop %v584
  %v592 = vmul.f32 %v591, 0.6931472
  %v593 = vrot.slane %v30, 5
  %v594 = vrot.slane %v31, 5
  %v597 = vmul.f32 %v529, %v593
  %v598 = vmul.f32 %v530, %v594
  %v599 = vmul.f32 %v531, %v593
  %v600 = vmul.f32 %v532, %v594
  %v601 = vlog2.pop %v597
  %v602 = vmul.f32 %v601, 0.6931472
  %v603 = vlog2.pop %v598
  %v604 = vmul.f32 %v603, 0.6931472
  %v605 = vlog2.pop %v599
  %v606 = vmul.f32 %v605, 0.6931472
  %v607 = vlog2.pop %v600
  %v608 = vmul.f32 %v607, 0.6931472
  %v613 = vcombine.low %v567, %v568
  %v614 = vcombine.low %v569, %v570
  %v617 = vsub.f32 %v26, %v613
  %v618 = vsub.f32 %v27, %v614
  %v619 = vand.u32 2147483647, %v617
  %v620 = vand.u32 2147483647, %v618
  %v625 = vcombine.low %v577, %v578
  %v626 = vcombine.low %v579, %v580
  %v629 = vsub.f32 %v26, %v625
  %v630 = vsub.f32 %v27, %v626
  %v631 = vand.u32 2147483647, %v629
  %v632 = vand.u32 2147483647, %v630
  %v635 = vrot.slane %v631, 5
  %v636 = vrot.slane %v635, 4
  %v637 = vrot.slane %v632, 5
  %v638 = vrot.slane %v637, 4
  %v641 = vadd.f32 %v619, %v636
  %v642 = vadd.f32 %v620, %v638
  %v647 = vcombine.low %v586, %v588
  %v648 = vcombine.low %v590, %v592
  %v651 = vsub.f32 %v26, %v647
  %v652 = vsub.f32 %v27, %v648
  %v653 = vand.u32 2147483647, %v651
  %v654 = vand.u32 2147483647, %v652
  %v657 = vrot.slane %v653, 6
  %v658 = vrot.slane %v657, 4
  %v659 = vrot.slane %v654, 6
  %v660 = vrot.slane %v659, 4
  %v663 = vadd.f32 %v641, %v658
  %v664 = vadd.f32 %v642, %v660
  %v669 = vcombine.low %v602, %v604
  %v670 = vcombine.low %v606, %v608
  %v673 = vsub.f32 %v26, %v669
  %v674 = vsub.f32 %v27, %v670
  %v675 = vand.u32 2147483647, %v673
  %v676 = vand.u32 2147483647, %v674
  %v679 = vrot.slane %v675, 7
  %v680 = vrot.slane %v679, 4
  %v681 = vrot.slane %v676, 7
  %v682 = vrot.slane %v681, 4
  %v685 = vadd.f32 %v663, %v680
  %v686 = vadd.f32 %v664, %v682
  %v689 = vlaneseq
  %v690 = vshrl.u32 %v689, 7
  %v691 = vsub.s32 0, %v690
  %v692 = vrot.slane %v685, %v691
  %v693 = vlaneseq
  %v694 = vshrl.u32 %v693, 7
  %v695 = vsub.s32 4, %v694
  %v696 = vrot.slane %v685, %v695
  %v697 = vlaneseq
  %v698 = vshrl.u32 %v697, 7
  %v699 = vsub.s32 0, %v698
  %v700 = vrot.slane %v686, %v699
  %v701 = vlaneseq
  %v702 = vshrl.u32 %v701, 7
  %v703 = vsub.s32 4, %v702
  %v704 = vrot.slane %v686, %v703
  %v709 = vsel %vm348, %v692, 0.0
  %v710 = vsel %vm349, %v696, 0.0
  %v711 = vsel %vm350, %v700, 0.0
  %v712 = vsel %vm351, %v704, 0.0
  %vm713 = vcmask 1040384
  %v714 = vsel %vm713, %v709, 0.0
  %v715 = vsel %vm713, %v710, 0.0
  %v716 = vadd.f32 %v714, %v715
  %717 = vadd.xlane.f32.xlu0 %v716
  %v718 = vpop.xlane.xlu0 %717
  %v719 = vsel %vm713, %v711, 0.0
  %v720 = vsel %vm713, %v712, 0.0
  %v721 = vadd.f32 %v719, %v720
  %722 = vadd.xlane.f32.xlu0 %v721
  %v723 = vpop.xlane.xlu0 %722
  %v724 = vsel %vm348, 1, 0
  %v725 = vsel %vm349, 1, 0
  %v726 = vsel %vm350, 1, 0
  %v727 = vsel %vm351, 1, 0
  %v728 = vcvt.s32.f32 %v724
  %v729 = vcvt.s32.f32 %v725
  %v730 = vcvt.s32.f32 %v726
  %v731 = vcvt.s32.f32 %v727
  %v732 = vadd.f32 %v728, %v729
  %733 = vadd.xlane.f32.xlu0 %v732
  %v734 = vpop.xlane.xlu0 %733
  %v735 = vadd.f32 %v730, %v731
  %736 = vadd.xlane.f32.xlu0 %v735
  %v737 = vpop.xlane.xlu0 %736
  %v738 = vsel %vm713, %v718, %v734
  %v739 = vsel %vm713, %v723, %v737
  %741 = vset.pattern.permute.xlu0 0
  %742 = vperm.xlu0 %741, %v738
  %v743 = vpop.permute.xlu0 %742
  %746 = vset.pattern.permute.xlu0 0
  %747 = vperm.xlu0 %746, %v739
  %v748 = vpop.permute.xlu0 %747
  %750 = vst [vmem:[%s5] sm:$0x3] %v743
  %751 = vst [vmem:[%s5 + $0x2] sm:$0x3] %v748
  // Predicated region
  $region22: #{set_criterion_loss.1} parent=0 // pred_check
    _
  $region23: #{set_criterion_loss.1} parent=0 // pred_check_branch
    %753 = sbr.rel (0) target = $region25
  $region24: #{set_criterion_loss.1} parent=0 // pred_region
    _
  $region25: #{set_criterion_loss.1} parent=0 // pred_fallthru
    _
  // Predicated region
  $region26: #{set_criterion_loss.1} parent=0 // pred_check
    _
  $region27: #{set_criterion_loss.1} parent=0 // pred_check_branch
    %755 = sbr.rel (0) target = $region29
  $region28: #{set_criterion_loss.1} parent=0 // pred_region
    _
  $region29: #{set_criterion_loss.1} parent=0 // pred_fallthru
    _

</llo_original>
